<compile_context>
chip_gen: v6e
topology: v6e:2x2x1
jax: 0.10.0
libtpu: 0.0.40
codegen_flags: <defaults>
</compile_context>

<pallas_src>
import jax
import jax.numpy as jnp
from jax import lax
from jax.experimental import pallas as pl
from jax.experimental.pallas import tpu as pltpu


_TOK_BLOCK = 512          # max tokens gathered per grid step
_ROWS_PER_GROUP = 8       # rows assembled per aligned (8, D) output store
_VMEM_HEADROOM = 8 << 20  # compiler scratch / pipeline-buffer headroom


def _round_up(x, m):
    return (x + m - 1) // m * m


def _vmem_capacity_bytes():
    """Physical VMEM per TensorCore; conservative 64 MiB (v7x) if unknown."""
    try:
        return int(pltpu.get_tpu_info().vmem_capacity_bytes)
    except Exception:
        return 64 << 20


def _resident_table_budget():
    cap = _vmem_capacity_bytes()
    # ~96 MiB on 128 MiB parts (v5e/v6e), ~48 MiB on 64 MiB parts (v7x).
    return min(int(0.75 * cap), cap - (16 << 20))


def _gather_kernel(ids_ref, tbl_hbm, out_ref, tbl_vmem):
    """Gather rows of a VMEM-resident table for one block of token ids.

    ids_ref : (1, TOK)       int32, SMEM -- ids for this block (streamed)
    tbl_hbm : (V_pad, D_pad) f32,   HBM  -- combined table, raw ref (pl.ANY)
    out_ref : (TOK, D_pad)   f32,   VMEM -- gathered rows for this block
    tbl_vmem: (V_pad, D_pad) f32,   VMEM -- single-buffered resident copy
    """
    # Load the table into VMEM exactly once; the scratch persists across all
    # (sequential, "arbitrary") grid steps.
    @pl.when(pl.program_id(0) == 0)
    def _():
        pltpu.sync_copy(tbl_hbm, tbl_vmem)

    tok = out_ref.shape[0]

    def body(g, carry):
        base = pl.multiple_of(g * _ROWS_PER_GROUP, _ROWS_PER_GROUP)
        # 8 dynamic single-row loads from the resident table ...
        rows = [tbl_vmem[pl.ds(ids_ref[0, base + r], 1), :]
                for r in range(_ROWS_PER_GROUP)]
        # ... assembled in-register and written with one aligned unmasked store.
        out_ref[pl.ds(base, _ROWS_PER_GROUP), :] = jnp.concatenate(rows, axis=0)
        return carry

    lax.fori_loop(0, tok // _ROWS_PER_GROUP, body, 0, unroll=2)


def prepare_embedding_table(pretrained_weight, trainable_weight):
    """Pre-sum + pad the two tables once per weight update (hoisted out of the
    per-call forward path).  Vocab padded to a multiple of 8, embed dim padded
    to a multiple of 128 so output stores stay lane-dense."""
    V, D = pretrained_weight.shape
    combined = (pretrained_weight + trainable_weight).astype(jnp.float32)
    v_pad = _round_up(V, 8)
    d_pad = _round_up(D, 128)
    return jnp.pad(combined, ((0, v_pad - V), (0, d_pad - D)))


def partial_trainable_embedding_forward(words, table, vocab_size, embed_dim, *,
                                        tok_block=_TOK_BLOCK):
    """words: [B, S] int ids; table: padded combined table from
    prepare_embedding_table.  Returns [B, S, embed_dim] float32 equal to
    trainable_embedding(words) + pretrained_embedding(words)."""
    B, S = words.shape
    V_pad, D_pad = table.shape
    N = B * S

    # Clamp ids like jnp.take(mode='clip') so kernel and fallback paths agree
    # on out-of-range ids (PyTorch would raise; a kernel cannot).
    flat_ids = jnp.clip(words.reshape(-1).astype(jnp.int32), 0, vocab_size - 1)

    table_bytes = V_pad * D_pad * 4
    if table_bytes > _resident_table_budget():
        # TODO(synk): manual multi-buffered DMA gather straight from the HBM
        # table for vocabularies too large to keep VMEM-resident.
        out = jnp.take(table, flat_ids, axis=0)
        return out[:, :embed_dim].reshape(B, S, embed_dim)

    tok = max(_ROWS_PER_GROUP, min(tok_block, _round_up(N, _ROWS_PER_GROUP)))
    assert tok % _ROWS_PER_GROUP == 0
    n_pad = _round_up(N, tok)
    nb = n_pad // tok
    ids_2d = jnp.pad(flat_ids, (0, n_pad - N)).reshape(nb, tok)

    # Single table copy (scratch) + double-buffered output tile + headroom.
    vmem_limit = min(_vmem_capacity_bytes(),
                     table_bytes + 2 * tok * D_pad * 4 + _VMEM_HEADROOM)

    out_flat = pl.pallas_call(
        _gather_kernel,
        out_shape=jax.ShapeDtypeStruct((n_pad, D_pad), jnp.float32),
        grid=(nb,),
        in_specs=[
            # token-id block streamed into SMEM (scalar-indexed by the copy loop)
            pl.BlockSpec((1, tok), lambda i: (i, 0),
                         memory_space=pltpu.MemorySpace.SMEM),
            # combined table stays in HBM; kernel DMAs it to scratch exactly once
            pl.BlockSpec(memory_space=pl.ANY),
        ],
        out_specs=pl.BlockSpec((tok, D_pad), lambda i: (i, 0)),
        scratch_shapes=[pltpu.VMEM((V_pad, D_pad), jnp.float32)],
        compiler_params=pltpu.CompilerParams(
            # "arbitrary": grid runs sequentially on one core, so the table
            # scratch loaded at step 0 is valid for every step, and v7x does
            # not pay a duplicate full-table load for a small grid.
            # TODO(synk): megacore-parallel variant (per-core table load) for
            # very large B*S on v7x.
            dimension_semantics=("arbitrary",),
            vmem_limit_bytes=int(vmem_limit),
        ),
    )(ids_2d, table)

    return out_flat[:N, :embed_dim].reshape(B, S, embed_dim)


def init_params(key, vocab_size, embed_dim, normalize_method="all"):
    """Deterministic synthetic parameter init mirroring the module's __init__."""
    # "Pretrained" embedding: random init (stands in for the loaded vectors),
    # then divided by its std (normalize_method == 'all'; torch.std -> ddof=1).
    pre = jax.random.normal(key, (vocab_size, embed_dim), dtype=jnp.float32)
    if normalize_method == "all":
        pre = pre / jnp.std(pre, ddof=1)
    elif normalize_method == "vector":
        pre = pre / jnp.std(pre, axis=0, keepdims=True, ddof=1)
    elif normalize_method == "none":
        pass
    else:
        raise NotImplementedError(normalize_method)
    # Trainable embedding: same embed_size, init_method=nn.init.zeros_.
    # TODO(synk): min_freq-based remapping of rare words to <unk> is a
    # vocabulary-construction detail; with a synthetic vocab every id simply
    # indexes its own trainable row.
    trn = jnp.zeros((vocab_size, embed_dim), dtype=jnp.float32)
    return pre, trn


if __name__ == "__main__":
    key = jax.random.PRNGKey(0)
    k_pre, k_words, k_trn, k_words3 = jax.random.split(key, 4)

    VOCAB = 1003   # non-multiple-of-8 vocab exercises V padding
    EMBED = 100    # non-multiple-of-128 embed dim exercises lane padding
    B, S = 2, 8

    pre_w, trn_w = init_params(k_pre, VOCAB, EMBED, normalize_method="all")
    words = jax.random.randint(k_words, (B, S), 0, VOCAB, dtype=jnp.int32)

    fwd = jax.jit(partial_trainable_embedding_forward, static_argnums=(2, 3))

    # Faithful-to-module case (trainable table initialized to zeros).
    table = prepare_embedding_table(pre_w, trn_w)
    out = jax.block_until_ready(fwd(words, table, VOCAB, EMBED))
    ref = jnp.take(trn_w, words, axis=0) + jnp.take(pre_w, words, axis=0)
    assert out.shape == (B, S, EMBED), out.shape
    assert out.dtype == jnp.float32, out.dtype
    assert jnp.allclose(out, ref, atol=1e-6), "mismatch (zeros trainable)"

    # As-if-trained trainable table (exercises the pre-summed add path).
    trn_w2 = 0.1 * jax.random.normal(k_trn, (VOCAB, EMBED), dtype=jnp.float32)
    table2 = prepare_embedding_table(pre_w, trn_w2)
    out2 = jax.block_until_ready(fwd(words, table2, VOCAB, EMBED))
    ref2 = jnp.take(trn_w2, words, axis=0) + jnp.take(pre_w, words, axis=0)
    assert jnp.allclose(out2, ref2, atol=1e-6), "mismatch (nonzero trainable)"

    # Multi-block grid (nb > 1): checks the scratch table persists across steps.
    B3, S3 = 4, 300
    words3 = jax.random.randint(k_words3, (B3, S3), 0, VOCAB, dtype=jnp.int32)
    out3 = jax.block_until_ready(fwd(words3, table2, VOCAB, EMBED))
    ref3 = jnp.take(trn_w2, words3, axis=0) + jnp.take(pre_w, words3, axis=0)
    assert jnp.allclose(out3, ref3, atol=1e-6), "mismatch (multi-block)"

    print("KERNEL_OK")
</pallas_src>

<mosaic_0001>
module attributes {stable_mosaic.version = 11 : i64} {
  func.func @_gather_kernel(%arg0: i32, %arg1: memref<1x16xi32, #tpu.memory_space<smem>>, %arg2: memref<1008x128xf32, #tpu.memory_space<any>>, %arg3: memref<16x128xf32, #tpu.memory_space<vmem>>, %arg4: memref<1008x128xf32, #tpu.memory_space<vmem>>) attributes {dimension_semantics = [#tpu.dimension_semantics<arbitrary>], iteration_bounds = array<i64: 1>, scalar_prefetch = 0 : i64, scratch_operands = 1 : i64, tpu.core_type = #tpu.core_type<tc>, window_params = [{transform_indices = @transform_0, window_bounds = array<i64: 1, 16>}, {}, {transform_indices = @transform_2, window_bounds = array<i64: 16, 128>}]} {
    %c0_i32 = arith.constant 0 : i32
    %0 = arith.cmpi eq, %arg0, %c0_i32 : i32
    %1 = arith.extui %0 : i1 to i32
    %c0_i32_0 = arith.constant 0 : i32
    %2 = arith.cmpi ne, %1, %c0_i32_0 : i32
    scf.if %2 {
      "tpu.region"() ({
        %93 = tpu.sem_alloc : memref<!tpu.dma_semaphore, #tpu.memory_space<semaphore_mem>>
        tpu.enqueue_dma source(%arg2 : memref<1008x128xf32, #tpu.memory_space<any>>) target(%arg4 : memref<1008x128xf32, #tpu.memory_space<vmem>>) target_semaphore(%93 : memref<!tpu.dma_semaphore, #tpu.memory_space<semaphore_mem>>)
        tpu.wait_dma2 semaphore(%93 : memref<!tpu.dma_semaphore, #tpu.memory_space<semaphore_mem>>) src(%arg2 : memref<1008x128xf32, #tpu.memory_space<any>>) dst(%arg4 : memref<1008x128xf32, #tpu.memory_space<vmem>>)
        tpu.yield
      }) : () -> ()
    } else {
    }
    %c0_i32_1 = arith.constant 0 : i32
    %c8_i32 = arith.constant 8 : i32
    %3 = arith.muli %c0_i32_1, %c8_i32 : i32
    %4 = tpu.assume_multiple %3, 8 : i32
    %c0_i32_2 = arith.constant 0 : i32
    %5 = arith.addi %4, %c0_i32_2 : i32
    %c0 = arith.constant 0 : index
    %6 = arith.index_cast %5 : i32 to index
    %7 = memref.load %arg1[%c0, %6] : memref<1x16xi32, #tpu.memory_space<smem>>
    %8 = arith.index_cast %7 : i32 to index
    %c0_3 = arith.constant 0 : index
    %9 = vector.load %arg4[%8, %c0_3] : memref<1008x128xf32, #tpu.memory_space<vmem>>, vector<1x128xf32>
    %c1_i32 = arith.constant 1 : i32
    %10 = arith.addi %4, %c1_i32 : i32
    %c0_4 = arith.constant 0 : index
    %11 = arith.index_cast %10 : i32 to index
    %12 = memref.load %arg1[%c0_4, %11] : memref<1x16xi32, #tpu.memory_space<smem>>
    %13 = arith.index_cast %12 : i32 to index
    %c0_5 = arith.constant 0 : index
    %14 = vector.load %arg4[%13, %c0_5] : memref<1008x128xf32, #tpu.memory_space<vmem>>, vector<1x128xf32>
    %c2_i32 = arith.constant 2 : i32
    %15 = arith.addi %4, %c2_i32 : i32
    %c0_6 = arith.constant 0 : index
    %16 = arith.index_cast %15 : i32 to index
    %17 = memref.load %arg1[%c0_6, %16] : memref<1x16xi32, #tpu.memory_space<smem>>
    %18 = arith.index_cast %17 : i32 to index
    %c0_7 = arith.constant 0 : index
    %19 = vector.load %arg4[%18, %c0_7] : memref<1008x128xf32, #tpu.memory_space<vmem>>, vector<1x128xf32>
    %c3_i32 = arith.constant 3 : i32
    %20 = arith.addi %4, %c3_i32 : i32
    %c0_8 = arith.constant 0 : index
    %21 = arith.index_cast %20 : i32 to index
    %22 = memref.load %arg1[%c0_8, %21] : memref<1x16xi32, #tpu.memory_space<smem>>
    %23 = arith.index_cast %22 : i32 to index
    %c0_9 = arith.constant 0 : index
    %24 = vector.load %arg4[%23, %c0_9] : memref<1008x128xf32, #tpu.memory_space<vmem>>, vector<1x128xf32>
    %c4_i32 = arith.constant 4 : i32
    %25 = arith.addi %4, %c4_i32 : i32
    %c0_10 = arith.constant 0 : index
    %26 = arith.index_cast %25 : i32 to index
    %27 = memref.load %arg1[%c0_10, %26] : memref<1x16xi32, #tpu.memory_space<smem>>
    %28 = arith.index_cast %27 : i32 to index
    %c0_11 = arith.constant 0 : index
    %29 = vector.load %arg4[%28, %c0_11] : memref<1008x128xf32, #tpu.memory_space<vmem>>, vector<1x128xf32>
    %c5_i32 = arith.constant 5 : i32
    %30 = arith.addi %4, %c5_i32 : i32
    %c0_12 = arith.constant 0 : index
    %31 = arith.index_cast %30 : i32 to index
    %32 = memref.load %arg1[%c0_12, %31] : memref<1x16xi32, #tpu.memory_space<smem>>
    %33 = arith.index_cast %32 : i32 to index
    %c0_13 = arith.constant 0 : index
    %34 = vector.load %arg4[%33, %c0_13] : memref<1008x128xf32, #tpu.memory_space<vmem>>, vector<1x128xf32>
    %c6_i32 = arith.constant 6 : i32
    %35 = arith.addi %4, %c6_i32 : i32
    %c0_14 = arith.constant 0 : index
    %36 = arith.index_cast %35 : i32 to index
    %37 = memref.load %arg1[%c0_14, %36] : memref<1x16xi32, #tpu.memory_space<smem>>
    %38 = arith.index_cast %37 : i32 to index
    %c0_15 = arith.constant 0 : index
    %39 = vector.load %arg4[%38, %c0_15] : memref<1008x128xf32, #tpu.memory_space<vmem>>, vector<1x128xf32>
    %c7_i32 = arith.constant 7 : i32
    %40 = arith.addi %4, %c7_i32 : i32
    %c0_16 = arith.constant 0 : index
    %41 = arith.index_cast %40 : i32 to index
    %42 = memref.load %arg1[%c0_16, %41] : memref<1x16xi32, #tpu.memory_space<smem>>
    %43 = arith.index_cast %42 : i32 to index
    %c0_17 = arith.constant 0 : index
    %44 = vector.load %arg4[%43, %c0_17] : memref<1008x128xf32, #tpu.memory_space<vmem>>, vector<1x128xf32>
    %45 = tpu.concatenate %9, %14, %19, %24, %29, %34, %39, %44 in 0 : vector<1x128xf32>, vector<1x128xf32>, vector<1x128xf32>, vector<1x128xf32>, vector<1x128xf32>, vector<1x128xf32>, vector<1x128xf32>, vector<1x128xf32> -> vector<8x128xf32>
    %46 = arith.index_cast %4 : i32 to index
    %c0_18 = arith.constant 0 : index
    %47 = vector.load %arg3[%46, %c0_18] : memref<16x128xf32, #tpu.memory_space<vmem>>, vector<8x128xf32>
    tpu.vector_store %arg3[%46, %c0_18], %45 {strides = array<i32>} : memref<16x128xf32, #tpu.memory_space<vmem>>, vector<8x128xf32>,
    %c1_i32_19 = arith.constant 1 : i32
    %c8_i32_20 = arith.constant 8 : i32
    %48 = arith.muli %c1_i32_19, %c8_i32_20 : i32
    %49 = tpu.assume_multiple %48, 8 : i32
    %c0_i32_21 = arith.constant 0 : i32
    %50 = arith.addi %49, %c0_i32_21 : i32
    %c0_22 = arith.constant 0 : index
    %51 = arith.index_cast %50 : i32 to index
    %52 = memref.load %arg1[%c0_22, %51] : memref<1x16xi32, #tpu.memory_space<smem>>
    %53 = arith.index_cast %52 : i32 to index
    %c0_23 = arith.constant 0 : index
    %54 = vector.load %arg4[%53, %c0_23] : memref<1008x128xf32, #tpu.memory_space<vmem>>, vector<1x128xf32>
    %c1_i32_24 = arith.constant 1 : i32
    %55 = arith.addi %49, %c1_i32_24 : i32
    %c0_25 = arith.constant 0 : index
    %56 = arith.index_cast %55 : i32 to index
    %57 = memref.load %arg1[%c0_25, %56] : memref<1x16xi32, #tpu.memory_space<smem>>
    %58 = arith.index_cast %57 : i32 to index
    %c0_26 = arith.constant 0 : index
    %59 = vector.load %arg4[%58, %c0_26] : memref<1008x128xf32, #tpu.memory_space<vmem>>, vector<1x128xf32>
    %c2_i32_27 = arith.constant 2 : i32
    %60 = arith.addi %49, %c2_i32_27 : i32
    %c0_28 = arith.constant 0 : index
    %61 = arith.index_cast %60 : i32 to index
    %62 = memref.load %arg1[%c0_28, %61] : memref<1x16xi32, #tpu.memory_space<smem>>
    %63 = arith.index_cast %62 : i32 to index
    %c0_29 = arith.constant 0 : index
    %64 = vector.load %arg4[%63, %c0_29] : memref<1008x128xf32, #tpu.memory_space<vmem>>, vector<1x128xf32>
    %c3_i32_30 = arith.constant 3 : i32
    %65 = arith.addi %49, %c3_i32_30 : i32
    %c0_31 = arith.constant 0 : index
    %66 = arith.index_cast %65 : i32 to index
    %67 = memref.load %arg1[%c0_31, %66] : memref<1x16xi32, #tpu.memory_space<smem>>
    %68 = arith.index_cast %67 : i32 to index
    %c0_32 = arith.constant 0 : index
    %69 = vector.load %arg4[%68, %c0_32] : memref<1008x128xf32, #tpu.memory_space<vmem>>, vector<1x128xf32>
    %c4_i32_33 = arith.constant 4 : i32
    %70 = arith.addi %49, %c4_i32_33 : i32
    %c0_34 = arith.constant 0 : index
    %71 = arith.index_cast %70 : i32 to index
    %72 = memref.load %arg1[%c0_34, %71] : memref<1x16xi32, #tpu.memory_space<smem>>
    %73 = arith.index_cast %72 : i32 to index
    %c0_35 = arith.constant 0 : index
    %74 = vector.load %arg4[%73, %c0_35] : memref<1008x128xf32, #tpu.memory_space<vmem>>, vector<1x128xf32>
    %c5_i32_36 = arith.constant 5 : i32
    %75 = arith.addi %49, %c5_i32_36 : i32
    %c0_37 = arith.constant 0 : index
    %76 = arith.index_cast %75 : i32 to index
    %77 = memref.load %arg1[%c0_37, %76] : memref<1x16xi32, #tpu.memory_space<smem>>
    %78 = arith.index_cast %77 : i32 to index
    %c0_38 = arith.constant 0 : index
    %79 = vector.load %arg4[%78, %c0_38] : memref<1008x128xf32, #tpu.memory_space<vmem>>, vector<1x128xf32>
    %c6_i32_39 = arith.constant 6 : i32
    %80 = arith.addi %49, %c6_i32_39 : i32
    %c0_40 = arith.constant 0 : index
    %81 = arith.index_cast %80 : i32 to index
    %82 = memref.load %arg1[%c0_40, %81] : memref<1x16xi32, #tpu.memory_space<smem>>
    %83 = arith.index_cast %82 : i32 to index
    %c0_41 = arith.constant 0 : index
    %84 = vector.load %arg4[%83, %c0_41] : memref<1008x128xf32, #tpu.memory_space<vmem>>, vector<1x128xf32>
    %c7_i32_42 = arith.constant 7 : i32
    %85 = arith.addi %49, %c7_i32_42 : i32
    %c0_43 = arith.constant 0 : index
    %86 = arith.index_cast %85 : i32 to index
    %87 = memref.load %arg1[%c0_43, %86] : memref<1x16xi32, #tpu.memory_space<smem>>
    %88 = arith.index_cast %87 : i32 to index
    %c0_44 = arith.constant 0 : index
    %89 = vector.load %arg4[%88, %c0_44] : memref<1008x128xf32, #tpu.memory_space<vmem>>, vector<1x128xf32>
    %90 = tpu.concatenate %54, %59, %64, %69, %74, %79, %84, %89 in 0 : vector<1x128xf32>, vector<1x128xf32>, vector<1x128xf32>, vector<1x128xf32>, vector<1x128xf32>, vector<1x128xf32>, vector<1x128xf32>, vector<1x128xf32> -> vector<8x128xf32>
    %91 = arith.index_cast %49 : i32 to index
    %c0_45 = arith.constant 0 : index
    %92 = vector.load %arg3[%91, %c0_45] : memref<16x128xf32, #tpu.memory_space<vmem>>, vector<8x128xf32>
    tpu.vector_store %arg3[%91, %c0_45], %90 {strides = array<i32>} : memref<16x128xf32, #tpu.memory_space<vmem>>, vector<8x128xf32>,
    %c2_i32_46 = arith.constant 2 : i32
    return
  }
  func.func @transform_0(%arg0: i32) -> (i32, i32) {
    %c0_i32 = arith.constant 0 : i32
    %c0_i32_0 = arith.constant 0 : i32
    return %arg0, %c0_i32 : i32, i32
  }
  func.func @transform_2(%arg0: i32) -> (i32, i32) {
    %c0_i32 = arith.constant 0 : i32
    %c0_i32_0 = arith.constant 0 : i32
    return %arg0, %c0_i32 : i32, i32
  }
}

</mosaic_0001>

<llo_original>
// kernel: partial_trainable_embedding_forward.1
$region0: #{partial_trainable_embedding_forward.1}
  #allocation0 [shape = 'u32[]', space=smem, size = 0x4, offset = 0x4, fixed_abs, tag = 'smem constant byte address 0x4 - core index']
  #allocation1 [shape = 'u32[144,128]{1,0:T(1,128)}', space=vmem, size = 0x12000, scoped, tag = 'internal scratch']
  #allocation2 [shape = 'f32[1008,128]{1,0:T(8,128)}', space=vmem, size = 0x7e000, scoped, tag = 'scratch operand']
  #allocation6 [shape = 's32[]', space=sflag, size = 0x4, offset = 0, fixed_abs, tag = 'sflag constant byte address 0x0 - dummy sync flag']
  #allocation7 [shape = 's32[]', space=sflag, size = 0x4, offset = 0, fixed_abs, tag = 'sflag constant byte address 0x0 - dummy sync flag']
  #allocation8 [shape = 'u32[]', space=smem, size = 0x4, offset = 0x44, fixed_abs, tag = 'smem constant byte address 0x44 - assertion arg 0']
  #allocation9 [shape = 'u32[]', space=smem, size = 0x4, offset = 0x48, fixed_abs, tag = 'smem constant byte address 0x48 - assertion arg 1']
  %s0 = inlined_call_operand.vmem [shape: s32[1,16], index: 0, kind: input, shape index: {}]
  %s1 = inlined_call_operand.hbm [shape: f32[1008,128], index: 1, kind: input, shape index: {}]
  %s2 = inlined_call_operand.vmem [shape: f32[16,128], index: 2, kind: output, shape index: {}]
  %s3 = sld [smem:[#allocation0]]
  $region27: #{partial_trainable_embedding_forward.1} parent=0
    _
  %s5 = ssub.s32 1, %s3
  %s6 = scalar_select 0, %s5, %s3
  $region1: #{partial_trainable_embedding_forward.1} parent=0
    #allocation3 [shape = 'u8[512]{0}', space=smem, size = 0x200, scoped, tag = 'input window, operand 0, single buffered']
    #allocation4 [shape = 's32[1]{0}', space=sflag, size = 0x4, scoped, tag = 'scoped memory for partial_trainable_embedding_forward.1']
    %7 = vsyncpa [#allocation4], 0
    // Predicated region
    $region2: #{partial_trainable_embedding_forward.1} parent=1 // pred_check
      _
    $region3: #{partial_trainable_embedding_forward.1} parent=1 // pred_check_branch
      %9 = sbr.rel (0) target = $region5
    $region4: #{partial_trainable_embedding_forward.1} parent=1 // pred_region
      %s11 = ssub.s32 16, 16
      %12 = vsyncadd [#allocation4], %s11
      %s14 = sshll.u32 %s0, 4
      %s15 = int_to_ptr.vmem [resolvable:$true] %s14
      %17 = dma.vmem_to_smem %s15, 16, [#allocation3], [#allocation4]
    $region5: #{partial_trainable_embedding_forward.1} parent=1 // pred_fallthru
      _
    // Predicated region
    $region6: #{partial_trainable_embedding_forward.1} parent=1 // pred_check
      _
    $region7: #{partial_trainable_embedding_forward.1} parent=1 // pred_check_branch
      %19 = sbr.rel (0) target = $region9
    $region8: #{partial_trainable_embedding_forward.1} parent=1 // pred_region
      %20 = dma.done [#allocation4], 16
    $region9: #{partial_trainable_embedding_forward.1} parent=1 // pred_fallthru
      _
    %21 = sfence
    %p22 = scmp.eq.s32.totalorder 0, 0
    // Predicated region
    $region10: #{partial_trainable_embedding_forward.1} parent=1 // pred_check
      %p23 = pneg %p22
    $region11: #{partial_trainable_embedding_forward.1} parent=1 // pred_check_branch
      %25 = sbr.rel (%p23) target = $region13
    $region12: #{partial_trainable_embedding_forward.1} parent=1 // pred_region
      $region14: #{partial_trainable_embedding_forward.1} parent=12
        #allocation5 [shape = 's32[1]{0}', space=sflag, size = 0x4, scoped, tag = 'scoped memory for partial_trainable_embedding_forward.1']
        // Predicated region
        $region15: #{partial_trainable_embedding_forward.1} parent=14 // pred_check
          _
        $region16: #{partial_trainable_embedding_forward.1} parent=14 // pred_check_branch
          %27 = sbr.rel target = $region18
        $region17: #{partial_trainable_embedding_forward.1} parent=14 // pred_region
          %28 = sst [smem:[#allocation8]] [#allocation7]
          %29 = sst [smem:[#allocation9]] [#allocation6]
        $region18: #{partial_trainable_embedding_forward.1} parent=14 // pred_fallthru
          _
        %31 = shalt.err (0)
        %s33 = sshll.u32 [#allocation2], 4
        %s34 = int_to_ptr.vmem [resolvable:$true] %s33
        %36 = dma.hbm_to_vmem [thread:$0]  %s1, 16128, %s34, [#allocation5]
        %s37 = smul.u32 1008, 1
        %s38 = sshll.u32 %s37, 4
        %39 = dma.done [#allocation5], %s38
    $region13: #{partial_trainable_embedding_forward.1} parent=1 // pred_fallthru
      _
    %s40 = sld [smem:[#allocation3]]
    %s41 = scalar_lea.vmem [#allocation2], %s40
    %v42 = vld [vmem:[%s41] sm:$0x1]
    %s43 = sadd.s32 0, 1
    %s44 = sld [smem:[#allocation3 + %s43]]
    %s45 = scalar_lea.vmem [#allocation2], %s44
    %v46 = vld [vmem:[%s45] sm:$0x1]
    %s47 = sadd.s32 0, 2
    %s48 = sld [smem:[#allocation3 + %s47]]
    %s49 = scalar_lea.vmem [#allocation2], %s48
    %v50 = vld [vmem:[%s49] sm:$0x1]
    %s51 = sadd.s32 0, 3
    %s52 = sld [smem:[#allocation3 + %s51]]
    %s53 = scalar_lea.vmem [#allocation2], %s52
    %v54 = vld [vmem:[%s53] sm:$0x1]
    %s55 = sadd.s32 0, 4
    %s56 = sld [smem:[#allocation3 + %s55]]
    %s57 = scalar_lea.vmem [#allocation2], %s56
    %v58 = vld [vmem:[%s57] sm:$0x1]
    %s59 = sadd.s32 0, 5
    %s60 = sld [smem:[#allocation3 + %s59]]
    %s61 = scalar_lea.vmem [#allocation2], %s60
    %v62 = vld [vmem:[%s61] sm:$0x1]
    %s63 = sadd.s32 0, 6
    %s64 = sld [smem:[#allocation3 + %s63]]
    %s65 = scalar_lea.vmem [#allocation2], %s64
    %v66 = vld [vmem:[%s65] sm:$0x1]
    %s67 = sadd.s32 0, 7
    %s68 = sld [smem:[#allocation3 + %s67]]
    %s69 = scalar_lea.vmem [#allocation2], %s68
    %v70 = vld [vmem:[%s69] sm:$0x1]
    %v72 = vrot.slane %v46, 7
    %v75 = vrot.slane %v50, 6
    %v78 = vrot.slane %v54, 5
    %v81 = vrot.slane %v58, 4
    %v84 = vrot.slane %v62, 3
    %v87 = vrot.slane %v66, 2
    %v90 = vrot.slane %v70, 1
    %vm92 = vcmask 1040384
    %v93 = vsel %vm92, %v42, %v72
    %vm94 = vcmask 1041408
    %v95 = vsel %vm94, %v93, %v75
    %vm96 = vcmask 1042432
    %v97 = vsel %vm96, %v95, %v78
    %vm98 = vcmask 1043456
    %v99 = vsel %vm98, %v97, %v81
    %vm100 = vcmask 1044480
    %v101 = vsel %vm100, %v99, %v84
    %vm102 = vcmask 1045504
    %v103 = vsel %vm102, %v101, %v87
    %vm104 = vcmask 1046528
    %v105 = vsel %vm104, %v103, %v90
    %106 = vst [vmem:[%s2] sm:$0xff] %v105
    %s107 = sld [smem:[#allocation3 + $0x8]]
    %s108 = scalar_lea.vmem [#allocation2], %s107
    %v109 = vld [vmem:[%s108] sm:$0x1]
    %s110 = sadd.s32 8, 1
    %s111 = sld [smem:[#allocation3 + %s110]]
    %s112 = scalar_lea.vmem [#allocation2], %s111
    %v113 = vld [vmem:[%s112] sm:$0x1]
    %s114 = sadd.s32 8, 2
    %s115 = sld [smem:[#allocation3 + %s114]]
    %s116 = scalar_lea.vmem [#allocation2], %s115
    %v117 = vld [vmem:[%s116] sm:$0x1]
    %s118 = sadd.s32 8, 3
    %s119 = sld [smem:[#allocation3 + %s118]]
    %s120 = scalar_lea.vmem [#allocation2], %s119
    %v121 = vld [vmem:[%s120] sm:$0x1]
    %s122 = sadd.s32 8, 4
    %s123 = sld [smem:[#allocation3 + %s122]]
    %s124 = scalar_lea.vmem [#allocation2], %s123
    %v125 = vld [vmem:[%s124] sm:$0x1]
    %s126 = sadd.s32 8, 5
    %s127 = sld [smem:[#allocation3 + %s126]]
    %s128 = scalar_lea.vmem [#allocation2], %s127
    %v129 = vld [vmem:[%s128] sm:$0x1]
    %s130 = sadd.s32 8, 6
    %s131 = sld [smem:[#allocation3 + %s130]]
    %s132 = scalar_lea.vmem [#allocation2], %s131
    %v133 = vld [vmem:[%s132] sm:$0x1]
    %s134 = sadd.s32 8, 7
    %s135 = sld [smem:[#allocation3 + %s134]]
    %s136 = scalar_lea.vmem [#allocation2], %s135
    %v137 = vld [vmem:[%s136] sm:$0x1]
    %v139 = vrot.slane %v113, 7
    %v142 = vrot.slane %v117, 6
    %v145 = vrot.slane %v121, 5
    %v148 = vrot.slane %v125, 4
    %v151 = vrot.slane %v129, 3
    %v154 = vrot.slane %v133, 2
    %v157 = vrot.slane %v137, 1
    %v159 = vsel %vm92, %v109, %v139
    %v160 = vsel %vm94, %v159, %v142
    %v161 = vsel %vm96, %v160, %v145
    %v162 = vsel %vm98, %v161, %v148
    %v163 = vsel %vm100, %v162, %v151
    %v164 = vsel %vm102, %v163, %v154
    %v165 = vsel %vm104, %v164, %v157
    %s166 = scalar_lea.vmem %s2, 8
    %167 = vst [vmem:[%s166] sm:$0xff] %v165
    // Predicated region
    $region19: #{partial_trainable_embedding_forward.1} parent=1 // pred_check
      _
    $region20: #{partial_trainable_embedding_forward.1} parent=1 // pred_check_branch
      %169 = sbr.rel (0) target = $region22
    $region21: #{partial_trainable_embedding_forward.1} parent=1 // pred_region
      _
    $region22: #{partial_trainable_embedding_forward.1} parent=1 // pred_fallthru
      _
    // Predicated region
    $region23: #{partial_trainable_embedding_forward.1} parent=1 // pred_check
      _
    $region24: #{partial_trainable_embedding_forward.1} parent=1 // pred_check_branch
      %171 = sbr.rel (0) target = $region26
    $region25: #{partial_trainable_embedding_forward.1} parent=1 // pred_region
      _
    $region26: #{partial_trainable_embedding_forward.1} parent=1 // pred_fallthru
      _
    %172 = vsyncpa [#allocation4], 1

</llo_original>
